<compile_context>
chip_gen: v7x
topology: tpu7x:2x2x1
jax: 0.10.0
libtpu: 0.0.40
codegen_flags: <defaults>
</compile_context>

<pallas_src>
import math
import functools

import numpy as np
import jax
import jax.numpy as jnp
from jax.experimental import pallas as pl
from jax.experimental.pallas import tpu as pltpu

# ---------------------------------------------------------------------------
# Problem sizes (small, consistent with the module's forward)
# ---------------------------------------------------------------------------
N_BATCH = 2          # batch per view
C_IN = 4             # input channels
H = W = 16           # spatial
FEAT_DIM = 32        # stand-in for resnet50().output_dim (2048 in the real model)
PROJ_DIM = 128       # projection_MLP default out_dim
TEMPERATURE = 0.5

FEAT_PAD = ((FEAT_DIM + 127) // 128) * 128   # hidden width padded to full lanes

_VMEM = pl.BlockSpec(memory_space=pltpu.MemorySpace.VMEM)
_SMEM = pl.BlockSpec(memory_space=pltpu.MemorySpace.SMEM)


# ---------------------------------------------------------------------------
# Fused kernel: encoder (both views) + NT-Xent loss
# ---------------------------------------------------------------------------
def _simclr_kernel(x1_ref, x2_ref, wg_ref, bg_ref, w3_ref, b3_ref, loss_ref, h_scr,
                   *, n, c, hw, half, inv_hw, inv_t):
    """x1_ref/x2_ref: (n, C*HW) f32, one row per sample of each view.
    wg/bg: folded (backbone Linear o projector.layer1), FEAT padded to 128 lanes.
    w3/b3: projector layer3, rows padded to 128 (w3 pre-cast to bf16).
    h_scr: (2*half, FEAT_PAD) f32 VMEM scratch; rows [0,n) = view1, [half,half+n) =
    view2, remaining rows stay zero and are masked out of the loss."""
    p = 2 * half
    two_n = 2 * n
    feat_pad = h_scr.shape[1]

    # ---- encoder stage 1: in-kernel GAP + folded Linear + ReLU ------------------
    # GAP = per-channel lane reduction over contiguous HW slices; the small folded
    # (C, FEAT_PAD) weight is applied as C rank-1 updates (C tiny -> VPU FMA, the
    # MXU would run with K=4). No HW-inflated weight is ever materialized.
    h_scr[...] = jnp.zeros_like(h_scr)            # padded rows stay exactly zero

    def stage1(x_ref, row_off):
        acc = jnp.zeros((n, feat_pad), jnp.float32)
        for j in range(c):                        # static unroll, C is tiny
            pooled = jnp.sum(x_ref[:, pl.ds(j * hw, hw)], axis=1,
                             keepdims=True) * inv_hw                 # (n, 1)
            acc = acc + pooled * wg_ref[pl.ds(j, 1), :]              # (n, FEAT_PAD)
        h_scr[pl.ds(row_off, n), :] = jnp.maximum(acc + bg_ref[...], 0.0)

    stage1(x1_ref, 0)       # view-1 rows [0, n)
    stage1(x2_ref, half)    # view-2 rows [half, half + n)

    # ---- encoder stage 2: projector layer3 for both views, one lane-dense (K=128)
    # bf16 MXU matmul with f32 accumulation. Zero-padded hidden lanes / padded rows
    # contribute nothing (w3 padded rows are zero; padded h rows are zero).
    z = jnp.dot(h_scr[...].astype(jnp.bfloat16), w3_ref[...],
                preferred_element_type=jnp.float32) + b3_ref[...]    # (P, PROJ) f32

    # ---- NT-Xent loss ------------------------------------------------------------
    def l2norm(v, eps):
        # v / max(||v||, eps) == v * rsqrt(max(||v||^2, eps^2)): EUP rsqrt, no divide.
        ss = jnp.sum(v * v, axis=1, keepdims=True)
        return v * jax.lax.rsqrt(jnp.maximum(ss, eps * eps))

    # F.normalize(dim=1, eps=1e-12) then cosine_similarity's re-normalization (1e-8).
    r = l2norm(l2norm(z, 1e-12), 1e-8)                               # (P, PROJ) f32

    # similarity matrix R R^T: bf16 operands, f32 accumulation.
    rb = r.astype(jnp.bfloat16)
    sim = jax.lax.dot_general(rb, rb, (((1,), (1,)), ((), ())),
                              preferred_element_type=jnp.float32)    # (P, P) f32

    row = jax.lax.broadcasted_iota(jnp.int32, (p, p), 0)
    col = jax.lax.broadcasted_iota(jnp.int32, (p, p), 1)
    # real (non-padded) indices are [0, n) and [half, half + n)
    col_real = jnp.logical_or(col < n,
                              jnp.logical_and(col >= half, col < half + n))
    valid = jnp.logical_and(col != row, col_real)    # negatives + positive, no self/pad

    logits = sim * inv_t
    masked = jnp.where(valid, logits, -1e30)          # f32: exp underflows to exactly 0
    m = jnp.max(masked, axis=1, keepdims=True)
    ssum = jnp.sum(jnp.exp(masked - m), axis=1, keepdims=True)
    lse = m + jnp.log(ssum)                           # (P, 1)

    # positives: partner of row i is (i + half) mod P -> sublane roll (XLU), f32.
    pos = jnp.sum(r * pltpu.roll(r, shift=half, axis=0),
                  axis=1, keepdims=True) * inv_t      # (P, 1)

    rowv = jax.lax.broadcasted_iota(jnp.int32, (p, 1), 0)
    row_real = jnp.logical_or(rowv < n,
                              jnp.logical_and(rowv >= half, rowv < half + n))
    per_row = jnp.where(row_real, lse - pos, 0.0)     # cross-entropy rows (real only)
    loss_ref[0, 0] = jnp.sum(per_row) * (1.0 / two_n)  # scalar reduction -> SMEM


# ---------------------------------------------------------------------------
# Host-side parameter preparation: exact fold + lane padding, done ONCE outside jit
# ---------------------------------------------------------------------------
def prepare_params(params):
    w_fold = params["wb"] @ params["w1"]                       # (C, FEAT) exact fold
    b_fold = params["bb"] @ params["w1"] + params["b1"]        # (1, FEAT)
    pad = FEAT_PAD - w_fold.shape[1]
    wg = jnp.pad(w_fold, ((0, 0), (0, pad)))                   # (C, 128) f32 (VPU use)
    bg = jnp.pad(b_fold, ((0, 0), (0, pad)))                   # (1, 128) f32
    w3 = jnp.pad(params["w3"], ((0, pad), (0, 0))).astype(jnp.bfloat16)  # (128, PROJ)
    b3 = params["b3"]                                          # (1, PROJ) f32
    return {"wg": wg, "bg": bg, "w3": w3, "b3": b3}


# ---------------------------------------------------------------------------
# SimCLR forward (single kernel launch)
# ---------------------------------------------------------------------------
@jax.jit
def simclr_forward(x1, x2, folded):
    n, c, hh, ww = x1.shape
    hw = hh * ww
    half = ((n + 7) // 8) * 8      # per-view row pad; 2*half multiple of 16 (bf16-safe)
    p = 2 * half
    feat_pad = folded["wg"].shape[1]

    # metadata-only reshapes; no host-side pad/concatenate HBM traffic
    x1f = x1.reshape(n, c * hw)
    x2f = x2.reshape(n, c * hw)

    kernel = functools.partial(_simclr_kernel, n=n, c=c, hw=hw, half=half,
                               inv_hw=1.0 / hw, inv_t=1.0 / TEMPERATURE)
    loss = pl.pallas_call(
        kernel,
        out_shape=jax.ShapeDtypeStruct((1, 1), jnp.float32),
        in_specs=[_VMEM] * 6,
        out_specs=_SMEM,                                        # scalar loss in SMEM
        scratch_shapes=[pltpu.VMEM((p, feat_pad), jnp.float32)],
    )(x1f, x2f, folded["wg"], folded["bg"], folded["w3"], folded["b3"])
    return {"loss": loss[0, 0]}


# ---------------------------------------------------------------------------
# Deterministic parameter init (PyTorch-Linear-style uniform bounds)
# ---------------------------------------------------------------------------
def init_params(key):
    def lin(k, fan_in, fan_out):
        kw, kb = jax.random.split(k)
        bound = 1.0 / math.sqrt(fan_in)
        w = jax.random.uniform(kw, (fan_in, fan_out), jnp.float32, -bound, bound)
        b = jax.random.uniform(kb, (1, fan_out), jnp.float32, -bound, bound)
        return w, b

    k_bb, k_l1, k_l3 = jax.random.split(key, 3)
    wb, bb = lin(k_bb, C_IN, FEAT_DIM)        # backbone stub
    w1, b1 = lin(k_l1, FEAT_DIM, FEAT_DIM)    # projector layer1
    w3, b3 = lin(k_l3, FEAT_DIM, PROJ_DIM)    # projector layer3
    return {"wb": wb, "bb": bb, "w1": w1, "b1": b1, "w3": w3, "b3": b3}


# ---------------------------------------------------------------------------
# Pure-numpy reference replicating the literal PyTorch construction (unfolded params)
# ---------------------------------------------------------------------------
def _ref_forward(x1, x2, params):
    def enc(x):
        feats = x.reshape(x.shape[0], x.shape[1], -1).mean(-1)
        h = feats @ np.asarray(params["wb"]) + np.asarray(params["bb"])
        a1 = np.maximum(h @ np.asarray(params["w1"]) + np.asarray(params["b1"]), 0.0)
        return a1 @ np.asarray(params["w3"]) + np.asarray(params["b3"])

    z1, z2 = enc(np.asarray(x1)), enc(np.asarray(x2))
    z1 = z1 / np.maximum(np.linalg.norm(z1, axis=1, keepdims=True), 1e-12)
    z2 = z2 / np.maximum(np.linalg.norm(z2, axis=1, keepdims=True), 1e-12)
    N = z1.shape[0]
    rep = np.concatenate([z1, z2], axis=0)
    rep_n = rep / np.maximum(np.linalg.norm(rep, axis=1, keepdims=True), 1e-8)
    sim = rep_n @ rep_n.T
    l_pos = np.diagonal(sim, N)
    r_pos = np.diagonal(sim, -N)
    positives = np.concatenate([l_pos, r_pos]).reshape(2 * N, 1)
    diag = np.eye(2 * N, dtype=bool)
    diag[N:, :N] = diag[:N, N:] = diag[:N, :N]
    negatives = sim[~diag].reshape(2 * N, -1)
    logits = np.concatenate([positives, negatives], axis=1) / TEMPERATURE
    m = logits.max(axis=1, keepdims=True)
    lse = (m + np.log(np.exp(logits - m).sum(axis=1, keepdims=True))).squeeze(1)
    loss = np.sum(lse - logits[:, 0]) / (2 * N)
    return loss


# ---------------------------------------------------------------------------
if __name__ == "__main__":
    root = jax.random.PRNGKey(0)
    k_params, k_x1, k_x2 = jax.random.split(root, 3)

    params = init_params(k_params)
    folded = prepare_params(params)   # once, outside jit (no per-call re-fold in HBM)

    x1 = jax.random.normal(k_x1, (N_BATCH, C_IN, H, W), jnp.float32)
    x2 = jax.random.normal(k_x2, (N_BATCH, C_IN, H, W), jnp.float32)

    out = simclr_forward(x1, x2, folded)
    loss = jax.block_until_ready(out["loss"])

    ref_loss = _ref_forward(x1, x2, params)
    assert np.isfinite(float(loss))
    # bf16 MXU operands (projector layer3 + similarity matmul) -> relaxed tolerance.
    np.testing.assert_allclose(float(loss), float(ref_loss), rtol=1e-2, atol=1e-2)

    print("KERNEL_OK")
</pallas_src>

<mosaic_0001>
module attributes {stable_mosaic.version = 11 : i64} {
  func.func @_simclr_kernel(%arg0: memref<2x1024xf32, #tpu.memory_space<vmem>>, %arg1: memref<2x1024xf32, #tpu.memory_space<vmem>>, %arg2: memref<4x128xf32, #tpu.memory_space<vmem>>, %arg3: memref<1x128xf32, #tpu.memory_space<vmem>>, %arg4: memref<128x128xbf16, #tpu.memory_space<vmem>>, %arg5: memref<1x128xf32, #tpu.memory_space<vmem>>, %arg6: memref<1x1xf32, #tpu.memory_space<smem>>, %arg7: memref<16x128xf32, #tpu.memory_space<vmem>>) attributes {dimension_semantics = [], scalar_prefetch = 0 : i64, scratch_operands = 1 : i64, tpu.core_type = #tpu.core_type<tc>} {
    %cst = arith.constant 0.000000e+00 : f32
    %0 = vector.broadcast %cst : f32 to vector<16x128xf32>
    %c0 = arith.constant 0 : index
    %c0_0 = arith.constant 0 : index
    %1 = vector.load %arg7[%c0, %c0_0] : memref<16x128xf32, #tpu.memory_space<vmem>>, vector<16x128xf32>
    tpu.vector_store %arg7[%c0, %c0_0], %0 {strides = array<i32>} : memref<16x128xf32, #tpu.memory_space<vmem>>, vector<16x128xf32>,
    %cst_1 = arith.constant 0.000000e+00 : f32
    %2 = vector.broadcast %cst_1 : f32 to vector<2x128xf32>
    %c0_2 = arith.constant 0 : index
    %c0_3 = arith.constant 0 : index
    %3 = vector.load %arg0[%c0_2, %c0_3] : memref<2x1024xf32, #tpu.memory_space<vmem>>, vector<2x256xf32>
    %cst_4 = arith.constant dense<0.000000e+00> : vector<2xf32>
    %4 = vector.multi_reduction <add>, %3, %cst_4 [1] : vector<2x256xf32> to vector<2xf32>
    %5 = vector.shape_cast %4 : vector<2xf32> to vector<2x1xf32>
    %cst_5 = arith.constant 3.906250e-03 : f32
    %6 = vector.broadcast %cst_5 : f32 to vector<2x1xf32>
    %7 = arith.mulf %5, %6 : vector<2x1xf32>
    %c0_6 = arith.constant 0 : index
    %c0_7 = arith.constant 0 : index
    %8 = vector.load %arg2[%c0_6, %c0_7] : memref<4x128xf32, #tpu.memory_space<vmem>>, vector<1x128xf32>
    %9 = vector.broadcast %7 : vector<2x1xf32> to vector<2x128xf32>
    %10 = vector.broadcast %8 : vector<1x128xf32> to vector<2x128xf32>
    %11 = arith.mulf %9, %10 : vector<2x128xf32>
    %12 = arith.addf %2, %11 : vector<2x128xf32>
    %c0_8 = arith.constant 0 : index
    %c256 = arith.constant 256 : index
    %13 = vector.load %arg0[%c0_8, %c256] : memref<2x1024xf32, #tpu.memory_space<vmem>>, vector<2x256xf32>
    %cst_9 = arith.constant dense<0.000000e+00> : vector<2xf32>
    %14 = vector.multi_reduction <add>, %13, %cst_9 [1] : vector<2x256xf32> to vector<2xf32>
    %15 = vector.shape_cast %14 : vector<2xf32> to vector<2x1xf32>
    %cst_10 = arith.constant 3.906250e-03 : f32
    %16 = vector.broadcast %cst_10 : f32 to vector<2x1xf32>
    %17 = arith.mulf %15, %16 : vector<2x1xf32>
    %c1 = arith.constant 1 : index
    %c0_11 = arith.constant 0 : index
    %18 = vector.load %arg2[%c1, %c0_11] : memref<4x128xf32, #tpu.memory_space<vmem>>, vector<1x128xf32>
    %19 = vector.broadcast %17 : vector<2x1xf32> to vector<2x128xf32>
    %20 = vector.broadcast %18 : vector<1x128xf32> to vector<2x128xf32>
    %21 = arith.mulf %19, %20 : vector<2x128xf32>
    %22 = arith.addf %12, %21 : vector<2x128xf32>
    %c0_12 = arith.constant 0 : index
    %c512 = arith.constant 512 : index
    %23 = vector.load %arg0[%c0_12, %c512] : memref<2x1024xf32, #tpu.memory_space<vmem>>, vector<2x256xf32>
    %cst_13 = arith.constant dense<0.000000e+00> : vector<2xf32>
    %24 = vector.multi_reduction <add>, %23, %cst_13 [1] : vector<2x256xf32> to vector<2xf32>
    %25 = vector.shape_cast %24 : vector<2xf32> to vector<2x1xf32>
    %cst_14 = arith.constant 3.906250e-03 : f32
    %26 = vector.broadcast %cst_14 : f32 to vector<2x1xf32>
    %27 = arith.mulf %25, %26 : vector<2x1xf32>
    %c2 = arith.constant 2 : index
    %c0_15 = arith.constant 0 : index
    %28 = vector.load %arg2[%c2, %c0_15] : memref<4x128xf32, #tpu.memory_space<vmem>>, vector<1x128xf32>
    %29 = vector.broadcast %27 : vector<2x1xf32> to vector<2x128xf32>
    %30 = vector.broadcast %28 : vector<1x128xf32> to vector<2x128xf32>
    %31 = arith.mulf %29, %30 : vector<2x128xf32>
    %32 = arith.addf %22, %31 : vector<2x128xf32>
    %c0_16 = arith.constant 0 : index
    %c768 = arith.constant 768 : index
    %33 = vector.load %arg0[%c0_16, %c768] : memref<2x1024xf32, #tpu.memory_space<vmem>>, vector<2x256xf32>
    %cst_17 = arith.constant dense<0.000000e+00> : vector<2xf32>
    %34 = vector.multi_reduction <add>, %33, %cst_17 [1] : vector<2x256xf32> to vector<2xf32>
    %35 = vector.shape_cast %34 : vector<2xf32> to vector<2x1xf32>
    %cst_18 = arith.constant 3.906250e-03 : f32
    %36 = vector.broadcast %cst_18 : f32 to vector<2x1xf32>
    %37 = arith.mulf %35, %36 : vector<2x1xf32>
    %c3 = arith.constant 3 : index
    %c0_19 = arith.constant 0 : index
    %38 = vector.load %arg2[%c3, %c0_19] : memref<4x128xf32, #tpu.memory_space<vmem>>, vector<1x128xf32>
    %39 = vector.broadcast %37 : vector<2x1xf32> to vector<2x128xf32>
    %40 = vector.broadcast %38 : vector<1x128xf32> to vector<2x128xf32>
    %41 = arith.mulf %39, %40 : vector<2x128xf32>
    %42 = arith.addf %32, %41 : vector<2x128xf32>
    %c0_20 = arith.constant 0 : index
    %c0_21 = arith.constant 0 : index
    %43 = vector.load %arg3[%c0_20, %c0_21] : memref<1x128xf32, #tpu.memory_space<vmem>>, vector<1x128xf32>
    %44 = vector.broadcast %43 : vector<1x128xf32> to vector<2x128xf32>
    %45 = arith.addf %42, %44 : vector<2x128xf32>
    %cst_22 = arith.constant 0.000000e+00 : f32
    %46 = vector.broadcast %cst_22 : f32 to vector<2x128xf32>
    %47 = arith.maximumf %45, %46 : vector<2x128xf32>
    %c0_23 = arith.constant 0 : index
    %c0_24 = arith.constant 0 : index
    %48 = vector.load %arg7[%c0_23, %c0_24] : memref<16x128xf32, #tpu.memory_space<vmem>>, vector<2x128xf32>
    tpu.vector_store %arg7[%c0_23, %c0_24], %47 {strides = array<i32>} : memref<16x128xf32, #tpu.memory_space<vmem>>, vector<2x128xf32>,
    %cst_25 = arith.constant 0.000000e+00 : f32
    %49 = vector.broadcast %cst_25 : f32 to vector<2x128xf32>
    %c0_26 = arith.constant 0 : index
    %c0_27 = arith.constant 0 : index
    %50 = vector.load %arg1[%c0_26, %c0_27] : memref<2x1024xf32, #tpu.memory_space<vmem>>, vector<2x256xf32>
    %cst_28 = arith.constant dense<0.000000e+00> : vector<2xf32>
    %51 = vector.multi_reduction <add>, %50, %cst_28 [1] : vector<2x256xf32> to vector<2xf32>
    %52 = vector.shape_cast %51 : vector<2xf32> to vector<2x1xf32>
    %cst_29 = arith.constant 3.906250e-03 : f32
    %53 = vector.broadcast %cst_29 : f32 to vector<2x1xf32>
    %54 = arith.mulf %52, %53 : vector<2x1xf32>
    %c0_30 = arith.constant 0 : index
    %c0_31 = arith.constant 0 : index
    %55 = vector.load %arg2[%c0_30, %c0_31] : memref<4x128xf32, #tpu.memory_space<vmem>>, vector<1x128xf32>
    %56 = vector.broadcast %54 : vector<2x1xf32> to vector<2x128xf32>
    %57 = vector.broadcast %55 : vector<1x128xf32> to vector<2x128xf32>
    %58 = arith.mulf %56, %57 : vector<2x128xf32>
    %59 = arith.addf %49, %58 : vector<2x128xf32>
    %c0_32 = arith.constant 0 : index
    %c256_33 = arith.constant 256 : index
    %60 = vector.load %arg1[%c0_32, %c256_33] : memref<2x1024xf32, #tpu.memory_space<vmem>>, vector<2x256xf32>
    %cst_34 = arith.constant dense<0.000000e+00> : vector<2xf32>
    %61 = vector.multi_reduction <add>, %60, %cst_34 [1] : vector<2x256xf32> to vector<2xf32>
    %62 = vector.shape_cast %61 : vector<2xf32> to vector<2x1xf32>
    %cst_35 = arith.constant 3.906250e-03 : f32
    %63 = vector.broadcast %cst_35 : f32 to vector<2x1xf32>
    %64 = arith.mulf %62, %63 : vector<2x1xf32>
    %c1_36 = arith.constant 1 : index
    %c0_37 = arith.constant 0 : index
    %65 = vector.load %arg2[%c1_36, %c0_37] : memref<4x128xf32, #tpu.memory_space<vmem>>, vector<1x128xf32>
    %66 = vector.broadcast %64 : vector<2x1xf32> to vector<2x128xf32>
    %67 = vector.broadcast %65 : vector<1x128xf32> to vector<2x128xf32>
    %68 = arith.mulf %66, %67 : vector<2x128xf32>
    %69 = arith.addf %59, %68 : vector<2x128xf32>
    %c0_38 = arith.constant 0 : index
    %c512_39 = arith.constant 512 : index
    %70 = vector.load %arg1[%c0_38, %c512_39] : memref<2x1024xf32, #tpu.memory_space<vmem>>, vector<2x256xf32>
    %cst_40 = arith.constant dense<0.000000e+00> : vector<2xf32>
    %71 = vector.multi_reduction <add>, %70, %cst_40 [1] : vector<2x256xf32> to vector<2xf32>
    %72 = vector.shape_cast %71 : vector<2xf32> to vector<2x1xf32>
    %cst_41 = arith.constant 3.906250e-03 : f32
    %73 = vector.broadcast %cst_41 : f32 to vector<2x1xf32>
    %74 = arith.mulf %72, %73 : vector<2x1xf32>
    %c2_42 = arith.constant 2 : index
    %c0_43 = arith.constant 0 : index
    %75 = vector.load %arg2[%c2_42, %c0_43] : memref<4x128xf32, #tpu.memory_space<vmem>>, vector<1x128xf32>
    %76 = vector.broadcast %74 : vector<2x1xf32> to vector<2x128xf32>
    %77 = vector.broadcast %75 : vector<1x128xf32> to vector<2x128xf32>
    %78 = arith.mulf %76, %77 : vector<2x128xf32>
    %79 = arith.addf %69, %78 : vector<2x128xf32>
    %c0_44 = arith.constant 0 : index
    %c768_45 = arith.constant 768 : index
    %80 = vector.load %arg1[%c0_44, %c768_45] : memref<2x1024xf32, #tpu.memory_space<vmem>>, vector<2x256xf32>
    %cst_46 = arith.constant dense<0.000000e+00> : vector<2xf32>
    %81 = vector.multi_reduction <add>, %80, %cst_46 [1] : vector<2x256xf32> to vector<2xf32>
    %82 = vector.shape_cast %81 : vector<2xf32> to vector<2x1xf32>
    %cst_47 = arith.constant 3.906250e-03 : f32
    %83 = vector.broadcast %cst_47 : f32 to vector<2x1xf32>
    %84 = arith.mulf %82, %83 : vector<2x1xf32>
    %c3_48 = arith.constant 3 : index
    %c0_49 = arith.constant 0 : index
    %85 = vector.load %arg2[%c3_48, %c0_49] : memref<4x128xf32, #tpu.memory_space<vmem>>, vector<1x128xf32>
    %86 = vector.broadcast %84 : vector<2x1xf32> to vector<2x128xf32>
    %87 = vector.broadcast %85 : vector<1x128xf32> to vector<2x128xf32>
    %88 = arith.mulf %86, %87 : vector<2x128xf32>
    %89 = arith.addf %79, %88 : vector<2x128xf32>
    %c0_50 = arith.constant 0 : index
    %c0_51 = arith.constant 0 : index
    %90 = vector.load %arg3[%c0_50, %c0_51] : memref<1x128xf32, #tpu.memory_space<vmem>>, vector<1x128xf32>
    %91 = vector.broadcast %90 : vector<1x128xf32> to vector<2x128xf32>
    %92 = arith.addf %89, %91 : vector<2x128xf32>
    %cst_52 = arith.constant 0.000000e+00 : f32
    %93 = vector.broadcast %cst_52 : f32 to vector<2x128xf32>
    %94 = arith.maximumf %92, %93 : vector<2x128xf32>
    %c8 = arith.constant 8 : index
    %c0_53 = arith.constant 0 : index
    %95 = vector.load %arg7[%c8, %c0_53] : memref<16x128xf32, #tpu.memory_space<vmem>>, vector<2x128xf32>
    tpu.vector_store %arg7[%c8, %c0_53], %94 {strides = array<i32>} : memref<16x128xf32, #tpu.memory_space<vmem>>, vector<2x128xf32>,
    %c0_54 = arith.constant 0 : index
    %c0_55 = arith.constant 0 : index
    %96 = vector.load %arg7[%c0_54, %c0_55] : memref<16x128xf32, #tpu.memory_space<vmem>>, vector<16x128xf32>
    %97 = arith.truncf %96 : vector<16x128xf32> to vector<16x128xbf16>
    %c0_56 = arith.constant 0 : index
    %c0_57 = arith.constant 0 : index
    %98 = vector.load %arg4[%c0_56, %c0_57] : memref<128x128xbf16, #tpu.memory_space<vmem>>, vector<128x128xbf16>
    %cst_58 = arith.constant dense<0.000000e+00> : vector<16x128xf32>
    %99 = tpu.matmul %97, %98, %cst_58 {dimension_numbers = #tpu.dot_dimension_numbers<[1], [0], [0], [1], [0, 0, 1, 1], [], []>} : vector<16x128xbf16>, vector<128x128xbf16>, vector<16x128xf32> -> vector<16x128xf32>
    %c0_59 = arith.constant 0 : index
    %c0_60 = arith.constant 0 : index
    %100 = vector.load %arg5[%c0_59, %c0_60] : memref<1x128xf32, #tpu.memory_space<vmem>>, vector<1x128xf32>
    %101 = vector.broadcast %100 : vector<1x128xf32> to vector<16x128xf32>
    %102 = arith.addf %99, %101 : vector<16x128xf32>
    %103 = arith.mulf %102, %102 : vector<16x128xf32>
    %cst_61 = arith.constant dense<0.000000e+00> : vector<16xf32>
    %104 = vector.multi_reduction <add>, %103, %cst_61 [1] : vector<16x128xf32> to vector<16xf32>
    %105 = vector.shape_cast %104 : vector<16xf32> to vector<16x1xf32>
    %cst_62 = arith.constant 1.000000e-24 : f32
    %106 = vector.broadcast %cst_62 : f32 to vector<16x1xf32>
    %107 = arith.maximumf %105, %106 : vector<16x1xf32>
    %108 = math.rsqrt %107 : vector<16x1xf32>
    %109 = vector.broadcast %108 : vector<16x1xf32> to vector<16x128xf32>
    %110 = arith.mulf %102, %109 : vector<16x128xf32>
    %111 = arith.mulf %110, %110 : vector<16x128xf32>
    %cst_63 = arith.constant dense<0.000000e+00> : vector<16xf32>
    %112 = vector.multi_reduction <add>, %111, %cst_63 [1] : vector<16x128xf32> to vector<16xf32>
    %113 = vector.shape_cast %112 : vector<16xf32> to vector<16x1xf32>
    %cst_64 = arith.constant 1.000000e-16 : f32
    %114 = vector.broadcast %cst_64 : f32 to vector<16x1xf32>
    %115 = arith.maximumf %113, %114 : vector<16x1xf32>
    %116 = math.rsqrt %115 : vector<16x1xf32>
    %117 = vector.broadcast %116 : vector<16x1xf32> to vector<16x128xf32>
    %118 = arith.mulf %110, %117 : vector<16x128xf32>
    %119 = arith.truncf %118 : vector<16x128xf32> to vector<16x128xbf16>
    %cst_65 = arith.constant dense<0.000000e+00> : vector<16x16xf32>
    %120 = tpu.matmul %119, %119, %cst_65 {dimension_numbers = #tpu.dot_dimension_numbers<[1], [1], [0], [0], [0, 0, 1, 0], [], []>} : vector<16x128xbf16>, vector<16x128xbf16>, vector<16x16xf32> -> vector<16x16xf32>
    %121 = tpu.iota {dimensions = array<i32: 0>} : vector<16x16xi32>
    %122 = tpu.iota {dimensions = array<i32: 1>} : vector<16x16xi32>
    %c2_i32 = arith.constant 2 : i32
    %123 = vector.broadcast %c2_i32 : i32 to vector<16x16xi32>
    %124 = arith.cmpi slt, %122, %123 : vector<16x16xi32>
    %c8_i32 = arith.constant 8 : i32
    %125 = vector.broadcast %c8_i32 : i32 to vector<16x16xi32>
    %126 = arith.cmpi sge, %122, %125 : vector<16x16xi32>
    %c10_i32 = arith.constant 10 : i32
    %127 = vector.broadcast %c10_i32 : i32 to vector<16x16xi32>
    %128 = arith.cmpi slt, %122, %127 : vector<16x16xi32>
    %129 = arith.andi %126, %128 : vector<16x16xi1>
    %130 = arith.ori %124, %129 : vector<16x16xi1>
    %131 = arith.cmpi ne, %122, %121 : vector<16x16xi32>
    %132 = arith.andi %131, %130 : vector<16x16xi1>
    %cst_66 = arith.constant 2.000000e+00 : f32
    %133 = vector.broadcast %cst_66 : f32 to vector<16x16xf32>
    %134 = arith.mulf %120, %133 : vector<16x16xf32>
    %cst_67 = arith.constant -1.000000e+30 : f32
    %135 = vector.broadcast %cst_67 : f32 to vector<16x16xf32>
    %136 = arith.select %132, %134, %135 : vector<16x16xi1>, vector<16x16xf32>
    %cst_68 = arith.constant dense<0xFF800000> : vector<16xf32>
    %137 = vector.multi_reduction <maximumf>, %136, %cst_68 [1] : vector<16x16xf32> to vector<16xf32>
    %138 = vector.shape_cast %137 : vector<16xf32> to vector<16x1xf32>
    %139 = vector.broadcast %138 : vector<16x1xf32> to vector<16x16xf32>
    %140 = arith.subf %136, %139 : vector<16x16xf32>
    %141 = math.exp %140 : vector<16x16xf32>
    %cst_69 = arith.constant dense<0.000000e+00> : vector<16xf32>
    %142 = vector.multi_reduction <add>, %141, %cst_69 [1] : vector<16x16xf32> to vector<16xf32>
    %143 = vector.shape_cast %142 : vector<16xf32> to vector<16x1xf32>
    %144 = math.log %143 : vector<16x1xf32>
    %145 = arith.addf %138, %144 : vector<16x1xf32>
    %c8_i32_70 = arith.constant 8 : i32
    %146 = tpu.dynamic_rotate %118 by %c8_i32_70 dim 0 : vector<16x128xf32>, i32 -> vector<16x128xf32>
    %147 = arith.mulf %118, %146 : vector<16x128xf32>
    %cst_71 = arith.constant dense<0.000000e+00> : vector<16xf32>
    %148 = vector.multi_reduction <add>, %147, %cst_71 [1] : vector<16x128xf32> to vector<16xf32>
    %149 = vector.shape_cast %148 : vector<16xf32> to vector<16x1xf32>
    %cst_72 = arith.constant 2.000000e+00 : f32
    %150 = vector.broadcast %cst_72 : f32 to vector<16x1xf32>
    %151 = arith.mulf %149, %150 : vector<16x1xf32>
    %152 = tpu.iota {dimensions = array<i32: 0>} : vector<16x1xi32>
    %c2_i32_73 = arith.constant 2 : i32
    %153 = vector.broadcast %c2_i32_73 : i32 to vector<16x1xi32>
    %154 = arith.cmpi slt, %152, %153 : vector<16x1xi32>
    %c8_i32_74 = arith.constant 8 : i32
    %155 = vector.broadcast %c8_i32_74 : i32 to vector<16x1xi32>
    %156 = arith.cmpi sge, %152, %155 : vector<16x1xi32>
    %c10_i32_75 = arith.constant 10 : i32
    %157 = vector.broadcast %c10_i32_75 : i32 to vector<16x1xi32>
    %158 = arith.cmpi slt, %152, %157 : vector<16x1xi32>
    %159 = arith.andi %156, %158 : vector<16x1xi1>
    %160 = arith.ori %154, %159 : vector<16x1xi1>
    %161 = arith.subf %145, %151 : vector<16x1xf32>
    %cst_76 = arith.constant 0.000000e+00 : f32
    %162 = vector.broadcast %cst_76 : f32 to vector<16x1xf32>
    %163 = arith.select %160, %161, %162 : vector<16x1xi1>, vector<16x1xf32>
    %164 = vector.shape_cast %163 : vector<16x1xf32> to vector<1x16x1xf32>
    %cst_77 = arith.constant dense<0.000000e+00> : vector<1xf32>
    %165 = vector.multi_reduction <add>, %164, %cst_77 [1, 2] : vector<1x16x1xf32> to vector<1xf32>
    %166 = vector.shape_cast %165 : vector<1xf32> to vector<1x1x1xf32>
    %167 = vector.extract %166[0, 0, 0] : f32 from vector<1x1x1xf32>
    %cst_78 = arith.constant 2.500000e-01 : f32
    %168 = arith.mulf %167, %cst_78 : f32
    %c0_79 = arith.constant 0 : index
    %c0_80 = arith.constant 0 : index
    %169 = memref.load %arg6[%c0_79, %c0_80] : memref<1x1xf32, #tpu.memory_space<smem>>
    memref.store %168, %arg6[%c0_79, %c0_80] : memref<1x1xf32, #tpu.memory_space<smem>>
    return
  }
}

</mosaic_0001>

<llo_original>
// kernel: simclr_forward.1
$region0: #{simclr_forward.1}
  #allocation0 [shape = 'u32[]', space=smem, size = 0x4, offset = 0x4, fixed_abs, tag = 'smem constant byte address 0x4 - core index']
  #allocation1 [shape = 'u32[144,128]{1,0:T(1,128)}', space=vmem, size = 0x12000, scoped, tag = 'internal scratch']
  #allocation2 [shape = 'f32[16,128]{1,0:T(8,128)}', space=vmem, size = 0x2000, scoped, tag = 'scratch operand']
  %s0 = inlined_call_operand.vmem [shape: f32[2,1024], index: 0, kind: input, shape index: {}]
  %s1 = inlined_call_operand.vmem [shape: f32[2,1024], index: 1, kind: input, shape index: {}]
  %s2 = inlined_call_operand.vmem [shape: f32[4,128], index: 2, kind: input, shape index: {}]
  %s3 = inlined_call_operand.vmem [shape: f32[1,128], index: 3, kind: input, shape index: {}]
  %s4 = inlined_call_operand.vmem [shape: bf16[128,128], index: 4, kind: input, shape index: {}]
  %s5 = inlined_call_operand.vmem [shape: f32[1,128], index: 5, kind: input, shape index: {}]
  %s6 = inlined_call_operand.hbm [shape: f32[1,1], index: 6, kind: output, shape index: {}]
  %s7 = sld [smem:[#allocation0]]
  $region34: #{simclr_forward.1} parent=0
    _
  %s9 = ssub.s32 1, %s7
  %s10 = scalar_select 0, %s9, %s7
  $region1: #{simclr_forward.1} parent=0
    #allocation3 [shape = 'u8[512]{0}', space=smem, size = 0x200, scoped, tag = 'output window, operand 0, single buffered']
    #allocation4 [shape = 's32[1]{0}', space=sflag, size = 0x4, scoped, tag = 'scoped memory for simclr_forward.1']
    %11 = vsyncpa [#allocation4], 0
    // Predicated region
    $region2: #{simclr_forward.1} parent=1 // pred_check
      _
    $region3: #{simclr_forward.1} parent=1 // pred_check_branch
      %13 = sbr.rel (0) target = $region5
    $region4: #{simclr_forward.1} parent=1 // pred_region
      _
    $region5: #{simclr_forward.1} parent=1 // pred_fallthru
      _
    // Predicated region
    $region6: #{simclr_forward.1} parent=1 // pred_check
      _
    $region7: #{simclr_forward.1} parent=1 // pred_check_branch
      %15 = sbr.rel (0) target = $region9
    $region8: #{simclr_forward.1} parent=1 // pred_region
      _
    $region9: #{simclr_forward.1} parent=1 // pred_fallthru
      _
    // Predicated region
    $region10: #{simclr_forward.1} parent=1 // pred_check
      _
    $region11: #{simclr_forward.1} parent=1 // pred_check_branch
      %17 = sbr.rel (0) target = $region13
    $region12: #{simclr_forward.1} parent=1 // pred_region
      _
    $region13: #{simclr_forward.1} parent=1 // pred_fallthru
      _
    // Predicated region
    $region14: #{simclr_forward.1} parent=1 // pred_check
      _
    $region15: #{simclr_forward.1} parent=1 // pred_check_branch
      %19 = sbr.rel (0) target = $region17
    $region16: #{simclr_forward.1} parent=1 // pred_region
      _
    $region17: #{simclr_forward.1} parent=1 // pred_fallthru
      _
    // Predicated region
    $region18: #{simclr_forward.1} parent=1 // pred_check
      _
    $region19: #{simclr_forward.1} parent=1 // pred_check_branch
      %21 = sbr.rel (0) target = $region21
    $region20: #{simclr_forward.1} parent=1 // pred_region
      _
    $region21: #{simclr_forward.1} parent=1 // pred_fallthru
      _
    // Predicated region
    $region22: #{simclr_forward.1} parent=1 // pred_check
      _
    $region23: #{simclr_forward.1} parent=1 // pred_check_branch
      %23 = sbr.rel (0) target = $region25
    $region24: #{simclr_forward.1} parent=1 // pred_region
      _
    $region25: #{simclr_forward.1} parent=1 // pred_fallthru
      _
    %25 = vst [vmem:[#allocation2] sm:$0xff] 0.0
    %26 = vst [vmem:[#allocation2 + $0x8] sm:$0xff] 0.0
    %v27 = vld [vmem:[%s0] sm:$0xf]
    %v30 = vunpack.c.l.s4 1983009808
    %v31 = vunpack.c.0.s8 %v30
    %v32 = vlaneseq
    %v33 = vshrl.u32 %v32, 7
    %v34 = vsub.s32 %v31, %v33
    %v35 = vrot.slane %v27, %v34
    %v36 = vcombine.high %v35, %v35
    %vm39 = vcmask 1041408
    %v40 = vsel %vm39, %v35, 0.0
    %v41 = vsel %vm39, %v36, 0.0
    %v42 = vadd.f32 %v40, %v41
    %43 = vadd.xlane.f32.xlu0 %v42
    %v44 = vpop.xlane.xlu0 %43
    %v45 = vmul.f32 %v44, 0.00390625
    %v46 = vld [vmem:[%s2] sm:$0x1]
    %v47 = vlaneseq
    %v48 = vshrl.u32 %v47, 7
    %v49 = vsub.s32 0, %v48
    %v50 = vrot.slane %v46, %v49
    %v51 = vmul.f32 %v45, %v50
    %v52 = vadd.f32 %v51, 0.0
    %v53 = vld [vmem:[%s0 + $0x4] sm:$0xf]
    %v56 = vunpack.c.l.s4 1983009808
    %v57 = vunpack.c.0.s8 %v56
    %v58 = vlaneseq
    %v59 = vshrl.u32 %v58, 7
    %v60 = vsub.s32 %v57, %v59
    %v61 = vrot.slane %v53, %v60
    %v62 = vcombine.high %v61, %v61
    %v65 = vsel %vm39, %v61, 0.0
    %v66 = vsel %vm39, %v62, 0.0
    %v67 = vadd.f32 %v65, %v66
    %68 = vadd.xlane.f32.xlu0 %v67
    %v69 = vpop.xlane.xlu0 %68
    %v70 = vmul.f32 %v69, 0.00390625
    %v71 = vld [vmem:[%s2 + $0x1] sm:$0x1]
    %v72 = vlaneseq
    %v73 = vshrl.u32 %v72, 7
    %v74 = vsub.s32 0, %v73
    %v75 = vrot.slane %v71, %v74
    %v76 = vmul.f32 %v70, %v75
    %v77 = vadd.f32 %v52, %v76
    %v78 = vld [vmem:[%s0 + $0x8] sm:$0xf]
    %v81 = vunpack.c.l.s4 1983009808
    %v82 = vunpack.c.0.s8 %v81
    %v83 = vlaneseq
    %v84 = vshrl.u32 %v83, 7
    %v85 = vsub.s32 %v82, %v84
    %v86 = vrot.slane %v78, %v85
    %v87 = vcombine.high %v86, %v86
    %v90 = vsel %vm39, %v86, 0.0
    %v91 = vsel %vm39, %v87, 0.0
    %v92 = vadd.f32 %v90, %v91
    %93 = vadd.xlane.f32.xlu0 %v92
    %v94 = vpop.xlane.xlu0 %93
    %v95 = vmul.f32 %v94, 0.00390625
    %v96 = vld [vmem:[%s2 + $0x2] sm:$0x1]
    %v97 = vlaneseq
    %v98 = vshrl.u32 %v97, 7
    %v99 = vsub.s32 0, %v98
    %v100 = vrot.slane %v96, %v99
    %v101 = vmul.f32 %v95, %v100
    %v102 = vadd.f32 %v77, %v101
    %v103 = vld [vmem:[%s0 + $0xc] sm:$0xf]
    %v106 = vunpack.c.l.s4 1983009808
    %v107 = vunpack.c.0.s8 %v106
    %v108 = vlaneseq
    %v109 = vshrl.u32 %v108, 7
    %v110 = vsub.s32 %v107, %v109
    %v111 = vrot.slane %v103, %v110
    %v112 = vcombine.high %v111, %v111
    %v115 = vsel %vm39, %v111, 0.0
    %v116 = vsel %vm39, %v112, 0.0
    %v117 = vadd.f32 %v115, %v116
    %118 = vadd.xlane.f32.xlu0 %v117
    %v119 = vpop.xlane.xlu0 %118
    %v120 = vmul.f32 %v119, 0.00390625
    %v121 = vld [vmem:[%s2 + $0x3] sm:$0x1]
    %v122 = vlaneseq
    %v123 = vshrl.u32 %v122, 7
    %v124 = vsub.s32 0, %v123
    %v125 = vrot.slane %v121, %v124
    %v126 = vmul.f32 %v120, %v125
    %v127 = vadd.f32 %v102, %v126
    %v128 = vld [vmem:[%s3] sm:$0x1]
    %v130 = vlaneseq
    %v131 = vshrl.u32 %v130, 7
    %v132 = vsub.s32 0, %v131
    %v133 = vrot.slane %v128, %v132
    %v135 = vadd.f32 %v127, %v133
    %v136 = vmax.f32 %v135, 0.0
    %137 = vst [vmem:[#allocation2] sm:$0x3] %v136
    %v138 = vld [vmem:[%s1] sm:$0xf]
    %v141 = vunpack.c.l.s4 1983009808
    %v142 = vunpack.c.0.s8 %v141
    %v143 = vlaneseq
    %v144 = vshrl.u32 %v143, 7
    %v145 = vsub.s32 %v142, %v144
    %v146 = vrot.slane %v138, %v145
    %v147 = vcombine.high %v146, %v146
    %v150 = vsel %vm39, %v146, 0.0
    %v151 = vsel %vm39, %v147, 0.0
    %v152 = vadd.f32 %v150, %v151
    %153 = vadd.xlane.f32.xlu0 %v152
    %v154 = vpop.xlane.xlu0 %153
    %v155 = vmul.f32 %v154, 0.00390625
    %v156 = vld [vmem:[%s2] sm:$0x1]
    %v157 = vlaneseq
    %v158 = vshrl.u32 %v157, 7
    %v159 = vsub.s32 0, %v158
    %v160 = vrot.slane %v156, %v159
    %v161 = vmul.f32 %v155, %v160
    %v162 = vadd.f32 %v161, 0.0
    %v163 = vld [vmem:[%s1 + $0x4] sm:$0xf]
    %v166 = vunpack.c.l.s4 1983009808
    %v167 = vunpack.c.0.s8 %v166
    %v168 = vlaneseq
    %v169 = vshrl.u32 %v168, 7
    %v170 = vsub.s32 %v167, %v169
    %v171 = vrot.slane %v163, %v170
    %v172 = vcombine.high %v171, %v171
    %v175 = vsel %vm39, %v171, 0.0
    %v176 = vsel %vm39, %v172, 0.0
    %v177 = vadd.f32 %v175, %v176
    %178 = vadd.xlane.f32.xlu0 %v177
    %v179 = vpop.xlane.xlu0 %178
    %v180 = vmul.f32 %v179, 0.00390625
    %v181 = vld [vmem:[%s2 + $0x1] sm:$0x1]
    %v182 = vlaneseq
    %v183 = vshrl.u32 %v182, 7
    %v184 = vsub.s32 0, %v183
    %v185 = vrot.slane %v181, %v184
    %v186 = vmul.f32 %v180, %v185
    %v187 = vadd.f32 %v162, %v186
    %v188 = vld [vmem:[%s1 + $0x8] sm:$0xf]
    %v191 = vunpack.c.l.s4 1983009808
    %v192 = vunpack.c.0.s8 %v191
    %v193 = vlaneseq
    %v194 = vshrl.u32 %v193, 7
    %v195 = vsub.s32 %v192, %v194
    %v196 = vrot.slane %v188, %v195
    %v197 = vcombine.high %v196, %v196
    %v200 = vsel %vm39, %v196, 0.0
    %v201 = vsel %vm39, %v197, 0.0
    %v202 = vadd.f32 %v200, %v201
    %203 = vadd.xlane.f32.xlu0 %v202
    %v204 = vpop.xlane.xlu0 %203
    %v205 = vmul.f32 %v204, 0.00390625
    %v206 = vld [vmem:[%s2 + $0x2] sm:$0x1]
    %v207 = vlaneseq
    %v208 = vshrl.u32 %v207, 7
    %v209 = vsub.s32 0, %v208
    %v210 = vrot.slane %v206, %v209
    %v211 = vmul.f32 %v205, %v210
    %v212 = vadd.f32 %v187, %v211
    %v213 = vld [vmem:[%s1 + $0xc] sm:$0xf]
    %v216 = vunpack.c.l.s4 1983009808
    %v217 = vunpack.c.0.s8 %v216
    %v218 = vlaneseq
    %v219 = vshrl.u32 %v218, 7
    %v220 = vsub.s32 %v217, %v219
    %v221 = vrot.slane %v213, %v220
    %v222 = vcombine.high %v221, %v221
    %v225 = vsel %vm39, %v221, 0.0
    %v226 = vsel %vm39, %v222, 0.0
    %v227 = vadd.f32 %v225, %v226
    %228 = vadd.xlane.f32.xlu0 %v227
    %v229 = vpop.xlane.xlu0 %228
    %v230 = vmul.f32 %v229, 0.00390625
    %v231 = vld [vmem:[%s2 + $0x3] sm:$0x1]
    %v232 = vlaneseq
    %v233 = vshrl.u32 %v232, 7
    %v234 = vsub.s32 0, %v233
    %v235 = vrot.slane %v231, %v234
    %v236 = vmul.f32 %v230, %v235
    %v237 = vadd.f32 %v212, %v236
    %v238 = vld [vmem:[%s3] sm:$0x1]
    %v240 = vlaneseq
    %v241 = vshrl.u32 %v240, 7
    %v242 = vsub.s32 0, %v241
    %v243 = vrot.slane %v238, %v242
    %v245 = vadd.f32 %v237, %v243
    %v246 = vmax.f32 %v245, 0.0
    %247 = vst [vmem:[#allocation2 + $0x8] sm:$0x3] %v246
    %v248 = vld [vmem:[#allocation2] sm:$0xff]
    %v249 = vld [vmem:[#allocation2 + $0x8] sm:$0xff]
    %v250 = vpack.c.bf16 %v249, %v248
    %v251 = vld [vmem:[%s4] sm:$0xf]
    %v252 = vld [vmem:[%s4 + $0x4] sm:$0xf]
    %v253 = vld [vmem:[%s4 + $0x8] sm:$0xf]
    %v254 = vld [vmem:[%s4 + $0xc] sm:$0xf]
    %v255 = vld [vmem:[%s4 + $0x10] sm:$0xf]
    %v256 = vld [vmem:[%s4 + $0x14] sm:$0xf]
    %v257 = vld [vmem:[%s4 + $0x18] sm:$0xf]
    %v258 = vld [vmem:[%s4 + $0x1c] sm:$0xf]
    %v259 = vld [vmem:[%s4 + $0x20] sm:$0xf]
    %v260 = vld [vmem:[%s4 + $0x24] sm:$0xf]
    %v261 = vld [vmem:[%s4 + $0x28] sm:$0xf]
    %v262 = vld [vmem:[%s4 + $0x2c] sm:$0xf]
    %v263 = vld [vmem:[%s4 + $0x30] sm:$0xf]
    %v264 = vld [vmem:[%s4 + $0x34] sm:$0xf]
    %v265 = vld [vmem:[%s4 + $0x38] sm:$0xf]
    %v266 = vld [vmem:[%s4 + $0x3c] sm:$0xf]
    %v267 = vld [vmem:[%s5] sm:$0x1]
    %v269 = vlaneseq
    %v270 = vshrl.u32 %v269, 7
    %v271 = vsub.s32 0, %v270
    %v272 = vrot.slane %v267, %v271
    %v290 = vunpack.c.l.b16 %v251
    %v291 = vunpack.c.l.b16 %v252
    %v292 = vunpack.c.l.b16 %v253
    %v293 = vunpack.c.l.b16 %v254
    %v294 = vunpack.c.l.b16 %v255
    %v295 = vunpack.c.l.b16 %v256
    %v296 = vunpack.c.l.b16 %v257
    %v297 = vunpack.c.l.b16 %v258
    %v298 = vunpack.c.l.b16 %v259
    %v299 = vunpack.c.l.b16 %v260
    %v300 = vunpack.c.l.b16 %v261
    %v301 = vunpack.c.l.b16 %v262
    %v302 = vunpack.c.l.b16 %v263
    %v303 = vunpack.c.l.b16 %v264
    %v304 = vunpack.c.l.b16 %v265
    %v305 = vunpack.c.l.b16 %v266
    %v306 = vpack.c.b16 %v291, %v290
    %v307 = vpack.c.b16 %v293, %v292
    %v308 = vpack.c.b16 %v295, %v294
    %v309 = vpack.c.b16 %v297, %v296
    %v310 = vpack.c.b16 %v299, %v298
    %v311 = vpack.c.b16 %v301, %v300
    %v312 = vpack.c.b16 %v303, %v302
    %v313 = vpack.c.b16 %v305, %v304
    %322 = vmatprep.subr.bf16.mxu0 0
    %323 = vmatpush1.bf16.msra.mxu0 %v306
    %324 = vmatprep.subr.bf16.mxu0 0
    %325 = vmatpush1.bf16.msra.mxu0 %v307
    %326 = vmatprep.subr.bf16.mxu0 0
    %327 = vmatpush1.bf16.msra.mxu0 %v308
    %328 = vmatprep.subr.bf16.mxu0 0
    %329 = vmatpush1.bf16.msra.mxu0 %v309
    %330 = vmatprep.subr.bf16.mxu0 0
    %331 = vmatpush1.bf16.msra.mxu0 %v310
    %332 = vmatprep.subr.bf16.mxu0 0
    %333 = vmatpush1.bf16.msra.mxu0 %v311
    %334 = vmatprep.subr.bf16.mxu0 0
    %335 = vmatpush1.bf16.msra.mxu0 %v312
    %336 = vmatprep.subr.bf16.mxu0 0
    %337 = vmatpush1.bf16.msra.mxu0 %v313
    %338 = vmatprep.subr.bf16.mxu0 0
    %339 = vmatpush1.bf16.msra.mxu0 0
    %340 = vmatprep.subr.bf16.mxu0 0
    %341 = vmatpush1.bf16.msra.mxu0 0
    %342 = vmatprep.subr.bf16.mxu0 0
    %343 = vmatpush1.bf16.msra.mxu0 0
    %344 = vmatprep.subr.bf16.mxu0 0
    %345 = vmatpush1.bf16.msra.mxu0 0
    %346 = vmatprep.subr.bf16.mxu0 0
    %347 = vmatpush1.bf16.msra.mxu0 0
    %348 = vmatprep.subr.bf16.mxu0 0
    %349 = vmatpush1.bf16.msra.mxu0 0
    %350 = vmatprep.subr.bf16.mxu0 0
    %351 = vmatpush1.bf16.msra.mxu0 0
    %352 = vmatprep.subr.bf16.mxu0 0
    %353 = vmatpush1.bf16.msra.mxu0 0
    %354 = vmatprep.mubr.bf16.mxu0 0
    %355 = vmatmul.mubr.bf16.gmra.mrb[0].mxu0 %v250
    %v356 = vpop.f32.mrb[0].mxu0
    %v357 = vadd.f32 %v272, %v356
    %v358 = vpop.f32.mrb[0].mxu0
    %v359 = vpop.f32.mrb[0].mxu0
    %v360 = vadd.f32 %v272, %v359
    %v361 = vpop.f32.mrb[0].mxu0
    %362 = vdwg.mxu0
    %v363 = vmul.f32 %v357, %v357
    %v364 = vmul.f32 %v360, %v360
    %365 = vadd.xlane.f32.xlu0 %v363
    %v366 = vpop.xlane.xlu0 %365
    %367 = vadd.xlane.f32.xlu0 %v364
    %v368 = vpop.xlane.xlu0 %367
    %v369 = vmax.f32 %v366, 1e-24
    %v370 = vmax.f32 %v368, 1e-24
    %v371 = vrsqrt.pop %v369
    %v372 = vrsqrt.pop %v370
    %v373 = vmul.f32 %v357, %v371
    %v374 = vmul.f32 %v360, %v372
    %v375 = vmul.f32 %v373, %v373
    %v376 = vmul.f32 %v374, %v374
    %377 = vadd.xlane.f32.xlu0 %v375
    %v378 = vpop.xlane.xlu0 %377
    %379 = vadd.xlane.f32.xlu0 %v376
    %v380 = vpop.xlane.xlu0 %379
    %v381 = vmax.f32 %v378, 1e-16
    %v382 = vmax.f32 %v380, 1e-16
    %v383 = vrsqrt.pop %v381
    %v384 = vrsqrt.pop %v382
    %v385 = vmul.f32 %v373, %v383
    %v386 = vmul.f32 %v374, %v384
    %v387 = vpack.c.bf16 %v386, %v385
    %388 = vmatprep.subr.bf16.mxu0 0
    %389 = vmatpush1.bf16.xpose.msra.mxu0 %v387
    %390 = vmatprep.subr.bf16.mxu0 0
    %391 = vmatpush1.bf16.xpose.msra.mxu0 0
    %392 = vmatprep.subr.bf16.mxu0 0
    %393 = vmatpush1.bf16.xpose.msra.mxu0 0
    %394 = vmatprep.subr.bf16.mxu0 0
    %395 = vmatpush1.bf16.xpose.msra.mxu0 0
    %396 = vmatprep.subr.bf16.mxu0 0
    %397 = vmatpush1.bf16.xpose.msra.mxu0 0
    %398 = vmatprep.subr.bf16.mxu0 0
    %399 = vmatpush1.bf16.xpose.msra.mxu0 0
    %400 = vmatprep.subr.bf16.mxu0 0
    %401 = vmatpush1.bf16.xpose.msra.mxu0 0
    %402 = vmatprep.subr.bf16.mxu0 0
    %403 = vmatpush1.bf16.xpose.msra.mxu0 0
    %404 = vmatprep.subr.bf16.mxu0 0
    %405 = vmatpush1.bf16.xpose.msra.mxu0 0
    %406 = vmatprep.subr.bf16.mxu0 0
    %407 = vmatpush1.bf16.xpose.msra.mxu0 0
    %408 = vmatprep.subr.bf16.mxu0 0
    %409 = vmatpush1.bf16.xpose.msra.mxu0 0
    %410 = vmatprep.subr.bf16.mxu0 0
    %411 = vmatpush1.bf16.xpose.msra.mxu0 0
    %412 = vmatprep.subr.bf16.mxu0 0
    %413 = vmatpush1.bf16.xpose.msra.mxu0 0
    %414 = vmatprep.subr.bf16.mxu0 0
    %415 = vmatpush1.bf16.xpose.msra.mxu0 0
    %416 = vmatprep.subr.bf16.mxu0 0
    %417 = vmatpush1.bf16.xpose.msra.mxu0 0
    %418 = vmatprep.subr.bf16.mxu0 0
    %419 = vmatpush1.bf16.xpose.msra.mxu0 0
    %420 = vmatprep.mubr.bf16.mxu0 0
    %421 = vmatmul.mubr.bf16.gmra.mrb[0].mxu0 %v387
    %v422 = vpop.f32.mrb[0].mxu0
    %v423 = vadd.f32 0.0, %v422
    %v424 = vpop.f32.mrb[0].mxu0
    %v425 = vpop.f32.mrb[0].mxu0
    %v426 = vadd.f32 0.0, %v425
    %v427 = vpop.f32.mrb[0].mxu0
    %428 = vdwg.mxu0
    %v429 = vlaneseq
    %v430 = vshrl.u32 %v429, 7
    %v431 = vadd.s32 %v430, 8
    %v432 = vlaneseq
    %v433 = vand.u32 %v432, 127
    %vm434 = vcmp.lt.s32.totalorder %v433, 2
    %vm435 = vcmp.ge.s32.totalorder %v433, 8
    %vm436 = vcmp.lt.s32.totalorder %v433, 10
    %vm437 = vmand %vm435, %vm436
    %vm438 = vmor %vm434, %vm437
    %vm439 = vcmp.ne.s32.totalorder %v433, %v430
    %vm440 = vcmp.ne.s32.totalorder %v433, %v431
    %vm441 = vmand %vm439, %vm438
    %vm442 = vmand %vm440, %vm438
    %v443 = vmul.f32 %v423, 2.0
    %v444 = vmul.f32 %v426, 2.0
    %v445 = vsel %vm441, %v443, -1e+30
    %v446 = vsel %vm442, %v444, -1e+30
    %vm447 = vcmask 130048
    %v448 = vsel %vm447, %v445, -inf
    %449 = vmax.xlane.f32.xlu0 %v448
    %v450 = vpop.xlane.xlu0 %449
    %v451 = vsel %vm447, %v446, -inf
    %452 = vmax.xlane.f32.xlu0 %v451
    %v453 = vpop.xlane.xlu0 %452
    %v454 = vsub.f32 %v445, %v450
    %v455 = vsub.f32 %v446, %v453
    %v456 = vmul.f32 %v454, 1.442695
    %v457 = vpow.pop %v456
    %v458 = vmul.f32 %v455, 1.442695
    %v459 = vpow.pop %v458
    %v460 = vsel %vm447, %v457, 0.0
    %461 = vadd.xlane.f32.xlu0 %v460
    %v462 = vpop.xlane.xlu0 %461
    %v463 = vsel %vm447, %v459, 0.0
    %464 = vadd.xlane.f32.xlu0 %v463
    %v465 = vpop.xlane.xlu0 %464
    %v466 = vlog2.pop %v462
    %v467 = vmul.f32 %v466, 0.6931472
    %v468 = vlog2.pop %v465
    %v469 = vmul.f32 %v468, 0.6931472
    %v470 = vadd.f32 %v450, %v467
    %v471 = vadd.f32 %v453, %v469
    %v472 = vmul.f32 %v385, %v386
    %473 = vadd.xlane.f32.xlu0 %v472
    %v474 = vpop.xlane.xlu0 %473
    %v475 = vmul.f32 %v474, 2.0
    %vm476 = vcmp.lt.s32.totalorder %v430, 2
    %vm477 = vcmp.lt.s32.totalorder %v431, 2
    %vm478 = vcmp.ge.s32.totalorder %v430, 8
    %vm479 = vcmp.ge.s32.totalorder %v431, 8
    %vm480 = vcmp.lt.s32.totalorder %v430, 10
    %vm481 = vcmp.lt.s32.totalorder %v431, 10
    %vm482 = vmand %vm478, %vm480
    %vm483 = vmand %vm479, %vm481
    %vm484 = vmor %vm476, %vm482
    %vm485 = vmor %vm477, %vm483
    %v486 = vsub.f32 %v470, %v475
    %v487 = vsub.f32 %v471, %v475
    %v488 = vsel %vm484, %v486, 0.0
    %v489 = vsel %vm485, %v487, 0.0
    %vm490 = vcmask 7168
    %v491 = vsel %vm490, %v488, 0.0
    %v492 = vsel %vm490, %v489, 0.0
    %v493 = vadd.f32 %v491, %v492
    %494 = vadd.xlane.f32.xlu0 %v493
    %v495 = vpop.xlane.xlu0 %494
    %v496 = vrot.slane %v495, 4
    %v497 = vadd.f32 %v495, %v496
    %v498 = vrot.slane %v497, 2
    %v499 = vadd.f32 %v497, %v498
    %v500 = vrot.slane %v499, 1
    %v501 = vadd.f32 %v499, %v500
    %s502 = vtos %v501
    %s503 = smul.f32 %s502, 0.25
    %s504 = scalar_lea.smem [#allocation3], 0
    %505 = sst [smem:[%s504]] %s503
    // Predicated region
    $region26: #{simclr_forward.1} parent=1 // pred_check
      _
    $region27: #{simclr_forward.1} parent=1 // pred_check_branch
      %507 = sbr.rel (0) target = $region29
    $region28: #{simclr_forward.1} parent=1 // pred_region
      %s509 = ssub.s32 16, 16
      %510 = vsyncadd [#allocation4], %s509
      %513 = dma.smem_to_hbm [#allocation3], 16, %s6, [#allocation4]
    $region29: #{simclr_forward.1} parent=1 // pred_fallthru
      _
    // Predicated region
    $region30: #{simclr_forward.1} parent=1 // pred_check
      _
    $region31: #{simclr_forward.1} parent=1 // pred_check_branch
      %515 = sbr.rel (0) target = $region33
    $region32: #{simclr_forward.1} parent=1 // pred_region
      %516 = dma.done [#allocation4], 16
    $region33: #{simclr_forward.1} parent=1 // pred_fallthru
      _
    %517 = sfence
    %518 = vsyncpa [#allocation4], 1

</llo_original>
